<compile_context>
chip_gen: v6e
topology: v6e:2x2x1
jax: 0.10.0
libtpu: 0.0.40
codegen_flags: <defaults>
</compile_context>

<pallas_src>
import functools

import jax
import jax.numpy as jnp
from jax import lax
from jax.experimental import pallas as pl
from jax.experimental.pallas import tpu as pltpu

GAMMA = 2.75

# TODO(synk): per-class alpha weighting (alpha.gather(0, targets)) not
# implemented; the module's default alpha=None path is what is reproduced.
# TODO(synk): out-of-range / ignore-index targets (e.g. -100) are not
# handled; targets are assumed to lie in [0, C).
# TODO(synk): if a small-C shape (C < 128, e.g. C=32) becomes a production
# shape, pack multiple samples per 128-lane row in the wrapper to recover
# vector-lane utilization.


def _row_focal_losses(x_raw, tgt, *, gamma, n_valid, bf16_math):
    """(T, C) logits tile + (T, 1) int32 targets -> (T, 1) f32 focal losses,
    with ragged-tail rows (global row id >= n_valid) zeroed."""
    t, c = x_raw.shape

    # Optional reduced-precision pre-exp math (v6e/v7x only); keep f32 on v5e.
    if bf16_math and x_raw.dtype == jnp.bfloat16:
        x = x_raw
    else:
        x = x_raw.astype(jnp.float32)

    # Numerically stable softmax pieces over the class (lane) axis.
    m = jnp.max(x, axis=-1, keepdims=True)               # (T,1)  lane-reduce #1
    xm = x - m                                            # (T,C)  VALU

    # One-hot predicate computed ONCE and reused.
    col = lax.broadcasted_iota(jnp.int32, (t, c), 1)      # (T,C)
    onehot = col == tgt                                    # (T,C)

    e = jnp.exp(xm.astype(jnp.float32))                    # (T,C)  EUP
    z = jnp.sum(e, axis=-1, keepdims=True)                 # (T,1)  lane-reduce #2

    # Target shifted logit via the one-hot mask (exactly one nonzero term,
    # so the masked sum has no accumulation error).          lane-reduce #3
    xt_m = jnp.sum(jnp.where(onehot, xm, 0).astype(jnp.float32),
                   axis=-1, keepdims=True)                  # (T,1) = x_t - m

    ce = jnp.log(z) - xt_m                                  # = logsumexp - x_t

    # pt = exp(-ce); derive e[target] = exp(x_t - m) instead of a 4th masked
    # lane reduction.  1 - pt loses accuracy only as pt -> 1, exactly where
    # the focal weight (1-pt)^gamma -> 0.
    e_t = jnp.exp(xt_m)
    one_minus_pt = jnp.maximum(1.0 - e_t / z, 0.0)          # (T,1), in [0, 1)

    # (1 - pt) ** gamma on the EUP; log(0) -> -inf -> exp(-inf) -> 0 is fine.
    w = jnp.exp(gamma * jnp.log(one_minus_pt))
    fl = w * ce                                             # (T,1) f32

    # Zero ragged-tail rows AFTER all row-local math and BEFORE any store /
    # cross-row reduction, so padded garbage never contributes.
    row = pl.program_id(0) * t + lax.broadcasted_iota(jnp.int32, (t, 1), 0)
    return jnp.where(row < n_valid, fl, 0.0)


def _focal_psum_kernel(logits_ref, targets_ref, psum_ref, *, gamma, n_valid,
                       bf16_math):
    """One (TILE_N, C) tile -> one lane-dense (1, 128) partial-sum block."""
    fl = _row_focal_losses(logits_ref[...], targets_ref[...], gamma=gamma,
                           n_valid=n_valid, bf16_math=bf16_math)
    s = jnp.sum(fl)                                # scalar partial sum (this tile)
    psum_ref[...] = jnp.broadcast_to(s, psum_ref.shape)


def _focal_rows_kernel(logits_ref, targets_ref, fl_ref, *, gamma, n_valid,
                       bf16_math):
    """One (TILE_N, C) tile -> per-sample focal losses (TILE_N, 1)."""
    fl_ref[...] = _row_focal_losses(logits_ref[...], targets_ref[...],
                                    gamma=gamma, n_valid=n_valid,
                                    bf16_math=bf16_math)


def _vmem_budget_and_limit():
    """(tile-sizing budget, vmem_limit_bytes), generation-aware."""
    try:
        cap = int(pltpu.get_tpu_info().vmem_capacity_bytes)
    except Exception:
        # Conservative fallback, valid on every generation.
        return 24 << 20, 32 << 20
    if cap >= (128 << 20):      # v5e / v6e: 128 MiB physical per TensorCore
        limit = 64 << 20
    else:                       # v7x: 64 MiB physical per TensorCore
        limit = 40 << 20
    return limit - (8 << 20), limit   # headroom for compiler scratch


def _choose_tile_n(n, c, itemsize, vmem_budget):
    """Largest batch tile whose FULL VMEM footprint fits the budget."""
    sub = max(8, 32 // max(1, itemsize))   # sublane pack: 8 f32 / 16 bf16
    n_pad = -(-n // sub) * sub
    per_row = (
        2 * c * itemsize       # double-buffered native logits tile
        + 2 * 128 * 4          # double-buffered (T,1) int32 targets, lane-padded
        + 4 * c * 4            # live f32 intermediates (x/xm, e, onehot, temps)
    )
    t = max(sub, vmem_budget // per_row)
    # Diminishing returns past ~2 MiB of streamed native tile (HBM roofline
    # saturates near 1 MiB); also bounds the f32 intermediate footprint.
    t = min(t, max(sub, (2 << 20) // max(1, c * itemsize)))
    t = max(sub, (t // sub) * sub)
    return int(min(t, n_pad))


def focal_loss(logits, targets, gamma=GAMMA, reduction="mean", tile_n=None,
               bf16_math=False):
    """logits: (N, C) float (kept in native HBM dtype); targets: (N,) int
    class indices.  Returns a scalar f32 for reduction='mean'/'sum', or the
    per-sample (N,) focal losses otherwise."""
    n, c = logits.shape
    itemsize = jnp.dtype(logits.dtype).itemsize
    sub = max(8, 32 // max(1, itemsize))

    vmem_budget, vmem_limit = _vmem_budget_and_limit()
    if tile_n is None:
        tile_n = _choose_tile_n(n, c, itemsize, vmem_budget)
    else:
        tile_n = max(sub, ((int(tile_n) + sub - 1) // sub) * sub)

    num_tiles = pl.cdiv(n, tile_n)
    targets2d = targets.astype(jnp.int32).reshape(n, 1)

    compiler_params = pltpu.CompilerParams(
        # Disjoint output blocks per grid step -> the batch axis is parallel
        # and can shard across both TensorCores on v7x.
        dimension_semantics=("parallel",),
        vmem_limit_bytes=int(vmem_limit),
    )
    in_specs = [
        # TODO(synk): sweep pipeline_mode=pl.Buffered(3) on this stream on
        # v7x if a profile shows exposed DMA after the VMEM accounting fix.
        pl.BlockSpec((tile_n, c), lambda i: (i, 0)),
        pl.BlockSpec((tile_n, 1), lambda i: (i, 0)),
    ]

    if reduction in ("mean", "sum"):
        kernel = functools.partial(
            _focal_psum_kernel, gamma=float(gamma), n_valid=n,
            bf16_math=bool(bf16_math))
        cost = pl.CostEstimate(
            flops=7 * n * c + 16 * n,
            transcendentals=n * c + 4 * n,
            bytes_accessed=n * c * itemsize + n * 4 + num_tiles * 128 * 4,
        )
        partial_sums = pl.pallas_call(
            kernel,
            out_shape=jax.ShapeDtypeStruct((1, num_tiles * 128), jnp.float32),
            grid=(num_tiles,),
            in_specs=in_specs,
            out_specs=pl.BlockSpec((1, 128), lambda i: (0, i)),
            compiler_params=compiler_params,
            cost_estimate=cost,
        )(logits, targets2d)
        # Tiny finish in plain JAX: one value per tile (lane 0 of each block).
        total = jnp.sum(partial_sums.reshape(num_tiles, 128)[:, 0])
        if reduction == "mean":
            return total / jnp.float32(n)
        return total

    # reduction == 'none' (or anything else, mirroring the PyTorch module's
    # else-branch): per-sample losses.  Output is only N*4 B so the (N, 1)
    # layout is kept.
    kernel = functools.partial(
        _focal_rows_kernel, gamma=float(gamma), n_valid=n,
        bf16_math=bool(bf16_math))
    cost = pl.CostEstimate(
        flops=7 * n * c + 16 * n,
        transcendentals=n * c + 4 * n,
        bytes_accessed=n * c * itemsize + n * 4 + n * 4,
    )
    per_sample = pl.pallas_call(
        kernel,
        out_shape=jax.ShapeDtypeStruct((n, 1), jnp.float32),
        grid=(num_tiles,),
        in_specs=in_specs,
        out_specs=pl.BlockSpec((tile_n, 1), lambda i: (i, 0)),
        compiler_params=compiler_params,
        cost_estimate=cost,
    )(logits, targets2d)
    return per_sample[:, 0]


def _focal_loss_ref(logits, targets, gamma=GAMMA, reduction="mean"):
    # Pure-JAX reference for sanity check.
    x = logits.astype(jnp.float32)
    lse = jax.nn.logsumexp(x, axis=-1)
    x_t = jnp.take_along_axis(x, targets[:, None].astype(jnp.int32),
                              axis=-1)[:, 0]
    ce = lse - x_t
    pt = jnp.exp(-ce)
    fl = (1.0 - pt) ** gamma * ce
    if reduction == "mean":
        return jnp.mean(fl)
    if reduction == "sum":
        return jnp.sum(fl)
    return fl


if __name__ == "__main__":
    key = jax.random.PRNGKey(0)
    k1, k2 = jax.random.split(key)

    # Small shapes; a forced small tile exercises the multi-step grid and the
    # ragged-tail masking path (20 rows -> 3 tiles of 8, last tile partial).
    N, C = 20, 32
    logits = jax.random.normal(k1, (N, C), dtype=jnp.float32)
    targets = jax.random.randint(k2, (N,), 0, C, dtype=jnp.int32)

    ref_mean = _focal_loss_ref(logits, targets)

    # Fused in-kernel partial-sum reduction, multi-tile + ragged tail.
    loss = jax.block_until_ready(focal_loss(logits, targets, tile_n=8))
    assert jnp.allclose(loss, ref_mean, atol=2e-5, rtol=2e-5), (loss, ref_mean)

    # Auto (generation-aware, footprint-aware) tile sizing.
    loss_auto = jax.block_until_ready(focal_loss(logits, targets))
    assert jnp.allclose(loss_auto, ref_mean, atol=2e-5, rtol=2e-5), (
        loss_auto, ref_mean)

    # Per-sample path (reduction='none').
    per = jax.block_until_ready(
        focal_loss(logits, targets, reduction="none", tile_n=8))
    ref_per = _focal_loss_ref(logits, targets, reduction="none")
    assert jnp.allclose(per, ref_per, atol=2e-5, rtol=2e-5), (per, ref_per)

    print("KERNEL_OK")
</pallas_src>

<mosaic_0001>
module attributes {stable_mosaic.version = 11 : i64} {
  func.func @_focal_psum_kernel(%arg0: i32, %arg1: memref<8x32xf32, #tpu.memory_space<vmem>>, %arg2: memref<8x1xi32, #tpu.memory_space<vmem>>, %arg3: memref<1x128xf32, #tpu.memory_space<vmem>>) attributes {dimension_semantics = [#tpu.dimension_semantics<parallel>], iteration_bounds = array<i64: 3>, scalar_prefetch = 0 : i64, scratch_operands = 0 : i64, tpu.core_type = #tpu.core_type<tc>, window_params = [{transform_indices = @transform_0, window_bounds = array<i64: 8, 32>}, {transform_indices = @transform_1, window_bounds = array<i64: 8, 1>}, {transform_indices = @transform_2, window_bounds = array<i64: 1, 128>}]} {
    %c0 = arith.constant 0 : index
    %c0_0 = arith.constant 0 : index
    %0 = vector.load %arg1[%c0, %c0_0] : memref<8x32xf32, #tpu.memory_space<vmem>>, vector<8x32xf32>
    %c0_1 = arith.constant 0 : index
    %c0_2 = arith.constant 0 : index
    %1 = vector.load %arg2[%c0_1, %c0_2] : memref<8x1xi32, #tpu.memory_space<vmem>>, vector<8x1xi32>
    %cst = arith.constant dense<0xFF800000> : vector<8xf32>
    %2 = vector.multi_reduction <maximumf>, %0, %cst [1] : vector<8x32xf32> to vector<8xf32>
    %3 = vector.shape_cast %2 : vector<8xf32> to vector<8x1xf32>
    %4 = vector.broadcast %3 : vector<8x1xf32> to vector<8x32xf32>
    %5 = arith.subf %0, %4 : vector<8x32xf32>
    %6 = tpu.iota {dimensions = array<i32: 1>} : vector<8x32xi32>
    %7 = vector.broadcast %1 : vector<8x1xi32> to vector<8x32xi32>
    %8 = arith.cmpi eq, %6, %7 : vector<8x32xi32>
    %9 = math.exp %5 : vector<8x32xf32>
    %cst_3 = arith.constant dense<0.000000e+00> : vector<8xf32>
    %10 = vector.multi_reduction <add>, %9, %cst_3 [1] : vector<8x32xf32> to vector<8xf32>
    %11 = vector.shape_cast %10 : vector<8xf32> to vector<8x1xf32>
    %c0_i32 = arith.constant 0 : i32
    %12 = arith.sitofp %c0_i32 : i32 to f32
    %13 = vector.broadcast %12 : f32 to vector<8x32xf32>
    %14 = arith.select %8, %5, %13 : vector<8x32xi1>, vector<8x32xf32>
    %cst_4 = arith.constant dense<0.000000e+00> : vector<8xf32>
    %15 = vector.multi_reduction <add>, %14, %cst_4 [1] : vector<8x32xf32> to vector<8xf32>
    %16 = vector.shape_cast %15 : vector<8xf32> to vector<8x1xf32>
    %17 = math.log %11 : vector<8x1xf32>
    %18 = arith.subf %17, %16 : vector<8x1xf32>
    %19 = math.exp %16 : vector<8x1xf32>
    %20 = arith.divf %19, %11 : vector<8x1xf32>
    %cst_5 = arith.constant 1.000000e+00 : f32
    %21 = vector.broadcast %cst_5 : f32 to vector<8x1xf32>
    %22 = arith.subf %21, %20 : vector<8x1xf32>
    %cst_6 = arith.constant 0.000000e+00 : f32
    %23 = vector.broadcast %cst_6 : f32 to vector<8x1xf32>
    %24 = arith.maximumf %22, %23 : vector<8x1xf32>
    %25 = math.log %24 : vector<8x1xf32>
    %cst_7 = arith.constant 2.750000e+00 : f32
    %26 = vector.broadcast %cst_7 : f32 to vector<8x1xf32>
    %27 = arith.mulf %26, %25 : vector<8x1xf32>
    %28 = math.exp %27 : vector<8x1xf32>
    %29 = arith.mulf %28, %18 : vector<8x1xf32>
    %c8_i32 = arith.constant 8 : i32
    %30 = arith.muli %arg0, %c8_i32 : i32
    %31 = tpu.iota {dimensions = array<i32: 0>} : vector<8x1xi32>
    %32 = vector.broadcast %30 : i32 to vector<8x1xi32>
    %33 = arith.addi %32, %31 : vector<8x1xi32>
    %c20_i32 = arith.constant 20 : i32
    %34 = vector.broadcast %c20_i32 : i32 to vector<8x1xi32>
    %35 = arith.cmpi slt, %33, %34 : vector<8x1xi32>
    %cst_8 = arith.constant 0.000000e+00 : f32
    %36 = vector.broadcast %cst_8 : f32 to vector<8x1xf32>
    %37 = arith.select %35, %29, %36 : vector<8x1xi1>, vector<8x1xf32>
    %38 = vector.shape_cast %37 : vector<8x1xf32> to vector<1x8x1xf32>
    %cst_9 = arith.constant dense<0.000000e+00> : vector<1xf32>
    %39 = vector.multi_reduction <add>, %38, %cst_9 [1, 2] : vector<1x8x1xf32> to vector<1xf32>
    %40 = vector.shape_cast %39 : vector<1xf32> to vector<1x1x1xf32>
    %41 = vector.extract %40[0, 0, 0] : f32 from vector<1x1x1xf32>
    %42 = vector.broadcast %41 : f32 to vector<1x128xf32>
    %c0_10 = arith.constant 0 : index
    %c0_11 = arith.constant 0 : index
    %43 = vector.load %arg3[%c0_10, %c0_11] : memref<1x128xf32, #tpu.memory_space<vmem>>, vector<1x128xf32>
    tpu.vector_store %arg3[%c0_10, %c0_11], %42 {strides = array<i32>} : memref<1x128xf32, #tpu.memory_space<vmem>>, vector<1x128xf32>,
    return
  }
  func.func @transform_0(%arg0: i32) -> (i32, i32) {
    %c0_i32 = arith.constant 0 : i32
    %c0_i32_0 = arith.constant 0 : i32
    return %arg0, %c0_i32 : i32, i32
  }
  func.func @transform_1(%arg0: i32) -> (i32, i32) {
    %c0_i32 = arith.constant 0 : i32
    %c0_i32_0 = arith.constant 0 : i32
    return %arg0, %c0_i32 : i32, i32
  }
  func.func @transform_2(%arg0: i32) -> (i32, i32) {
    %c0_i32 = arith.constant 0 : i32
    %c0_i32_0 = arith.constant 0 : i32
    return %c0_i32, %arg0 : i32, i32
  }
}

</mosaic_0001>

<llo_original>
// kernel: tpu_custom_call.1
$region0: #{tpu_custom_call.1}
  #allocation0 [shape = 'u32[]', space=smem, size = 0x4, offset = 0x4, fixed_abs, tag = 'smem constant byte address 0x4 - core index']
  #allocation1 [shape = 'u32[144,128]{1,0:T(1,128)}', space=vmem, size = 0x12000, scoped, tag = 'internal scratch']
  %s0 = inlined_call_operand.vmem [shape: f32[20,32], index: 0, kind: input, shape index: {}]
  %s1 = inlined_call_operand.vmem [shape: s32[20,1], index: 1, kind: input, shape index: {}]
  %s2 = inlined_call_operand.hbm [shape: f32[1,384], index: 2, kind: output, shape index: {}]
  %s3 = sld [smem:[#allocation0]]
  $region41: #{tpu_custom_call.1} parent=0
    _
  %s5 = ssub.s32 1, %s3
  %s6 = scalar_select 0, %s5, %s3
  $region1: #{tpu_custom_call.1} parent=0
    #allocation2 [shape = 'u8[1024]{0}', space=vmem, size = 0x400, scoped, tag = 'output window, operand 0']
    #allocation3 [shape = 's32[2]{0}', space=sflag, size = 0x8, scoped, tag = 'scoped memory for tpu_custom_call.1']
    %7 = vsyncpa [#allocation3], 0
    %s8 = scalar_lea.sflag [#allocation3], 1
    %9 = vsyncpa %s8, 0
    loop: start=0, step=1, limit=5
    $region2: #{tpu_custom_call.1} parent=1 // loop_pre_header
      _
    $region3: #{tpu_custom_call.1} parent=1 // loop_header
      %s11 = sphi 0, %s15
      %p12 = scmp.ge.s32.totalorder %s11, 5
      %s21 = sphi 0, %s23
      %s24 = sphi 0, %s21
      %s25 = sphi 0, %s24
      %s41 = sphi 0, %s25
      %s47 = sphi 0, %s49
      %s50 = sphi 0, %s47
      %s51 = sphi 0, %s50
      %s67 = sphi 0, %s51
      %s73 = sphi 0, %s75
      %s76 = sphi 0, %s73
      %s77 = sphi 0, %s76
      %s93 = sphi 0, %s77
    $region4: #{tpu_custom_call.1} parent=1 // loop_header_branch
      %14 = sbr.rel (%p12) target = $region8
    $region5: #{tpu_custom_call.1} parent=1 // loop_body
      %s16 = ssub.s32 %s11, 1
      %s17 = ssub.s32 %s11, 2
      %s18 = sadd.s32 %s11, 1
      %s19 = ssub.s32 %s11, %s18
      %p20 = scmp.eq.s32.totalorder %s19, 0
      %s22 = sadd.s32 %s21, 1
      %s23 = scalar_select %p20, %s21, %s22
      %p26 = pneg %p20
      %p27 = scmp.eq.s32.totalorder %s11, 2
      %p28 = por %p26, %p27
      %p29 = scmp.ne.s32.totalorder %s21, %s24
      %p30 = scmp.eq.s32.totalorder %s11, 0
      %p31 = por %p29, %p30
      %p32 = scmp.ne.s32.totalorder %s21, %s24
      %p33 = scmp.eq.s32.totalorder %s16, 2
      %p34 = por %p32, %p33
      %p35 = scmp.ne.s32.totalorder %s24, %s25
      %p36 = scmp.eq.s32.totalorder %s16, 0
      %p37 = por %p35, %p36
      %p38 = scmp.ne.s32.totalorder %s24, %s25
      %p39 = scmp.eq.s32.totalorder %s17, 2
      %p40 = por %p38, %p39
      %p42 = scmp.ne.s32.totalorder %s25, %s41
      %p43 = scmp.eq.s32.totalorder %s17, 0
      %p44 = por %p42, %p43
      %s45 = ssub.s32 %s11, %s18
      %p46 = scmp.eq.s32.totalorder %s45, 0
      %s48 = sadd.s32 %s47, 1
      %s49 = scalar_select %p46, %s47, %s48
      %p52 = pneg %p46
      %p53 = scmp.eq.s32.totalorder %s11, 2
      %p54 = por %p52, %p53
      %p55 = scmp.ne.s32.totalorder %s47, %s50
      %p56 = scmp.eq.s32.totalorder %s11, 0
      %p57 = por %p55, %p56
      %p58 = scmp.ne.s32.totalorder %s47, %s50
      %p59 = scmp.eq.s32.totalorder %s16, 2
      %p60 = por %p58, %p59
      %p61 = scmp.ne.s32.totalorder %s50, %s51
      %p62 = scmp.eq.s32.totalorder %s16, 0
      %p63 = por %p61, %p62
      %p64 = scmp.ne.s32.totalorder %s50, %s51
      %p65 = scmp.eq.s32.totalorder %s17, 2
      %p66 = por %p64, %p65
      %p68 = scmp.ne.s32.totalorder %s51, %s67
      %p69 = scmp.eq.s32.totalorder %s17, 0
      %p70 = por %p68, %p69
      %s71 = ssub.s32 %s11, %s18
      %p72 = scmp.eq.s32.totalorder %s71, 0
      %s74 = sadd.s32 %s73, 1
      %s75 = scalar_select %p72, %s73, %s74
      %p78 = pneg %p72
      %p79 = scmp.eq.s32.totalorder %s11, 2
      %p80 = por %p78, %p79
      %p81 = scmp.ne.s32.totalorder %s73, %s76
      %p82 = scmp.eq.s32.totalorder %s11, 0
      %p83 = por %p81, %p82
      %p84 = scmp.ne.s32.totalorder %s73, %s76
      %p85 = scmp.eq.s32.totalorder %s16, 2
      %p86 = por %p84, %p85
      %p87 = scmp.ne.s32.totalorder %s76, %s77
      %p88 = scmp.eq.s32.totalorder %s16, 0
      %p89 = por %p87, %p88
      %p90 = scmp.ne.s32.totalorder %s76, %s77
      %p91 = scmp.eq.s32.totalorder %s17, 2
      %p92 = por %p90, %p91
      %p94 = scmp.ne.s32.totalorder %s77, %s93
      %p95 = scmp.eq.s32.totalorder %s17, 0
      %p96 = por %p94, %p95
      %p97 = scmp.le.s32.totalorder 1, %s11
      %p98 = scmp.lt.s32.totalorder %s11, 4
      %p99 = pnand %p97, %p98
      %p100 = pneg %p99
      // Predicated region
      $region9: #{tpu_custom_call.1} parent=5 // pred_check
        _
      $region10: #{tpu_custom_call.1} parent=5 // pred_check_branch
        %102 = sbr.rel (%p99) target = $region12
      $region11: #{tpu_custom_call.1} parent=5 // pred_region
        %s103 = ssub.s32 %s11, 1
      $region12: #{tpu_custom_call.1} parent=5 // pred_fallthru
        _
      %p104 = scmp.lt.s32.totalorder %s11, 3
      // Predicated region
      $region13: #{tpu_custom_call.1} parent=5 // pred_check
        %p105 = pneg %p104
      $region14: #{tpu_custom_call.1} parent=5 // pred_check_branch
        %107 = sbr.rel (%p105) target = $region16
      $region15: #{tpu_custom_call.1} parent=5 // pred_region
        // Predicated region
        $region17: #{tpu_custom_call.1} parent=15 // pred_check
          %p108 = pneg %p31
        $region18: #{tpu_custom_call.1} parent=15 // pred_check_branch
          %110 = sbr.rel (%p108) target = $region20
        $region19: #{tpu_custom_call.1} parent=15 // pred_region
          %p111 = scmp.lt.s32.totalorder %s11, 2
          %s112 = scalar_select %p111, %s11, 2
          %s113 = smul.addr %s112, 8
          %s114 = scalar_lea.vmem %s0, %s113
        $region20: #{tpu_custom_call.1} parent=15 // pred_fallthru
          _
        // Predicated region
        $region21: #{tpu_custom_call.1} parent=15 // pred_check
          %p115 = pneg %p57
        $region22: #{tpu_custom_call.1} parent=15 // pred_check_branch
          %117 = sbr.rel (%p115) target = $region24
        $region23: #{tpu_custom_call.1} parent=15 // pred_region
          %p118 = scmp.lt.s32.totalorder %s11, 2
          %s119 = scalar_select %p118, %s11, 2
          %s120 = smul.addr %s119, 8
          %s121 = scalar_lea.vmem %s1, %s120
        $region24: #{tpu_custom_call.1} parent=15 // pred_fallthru
          _
      $region16: #{tpu_custom_call.1} parent=5 // pred_fallthru
        _
      %p122 = scmp.le.s32.totalorder 1, %s11
      %p123 = scmp.lt.s32.totalorder %s11, 4
      %p124 = pnand %p122, %p123
      %p125 = pneg %p124
      // Predicated region
      $region25: #{tpu_custom_call.1} parent=5 // pred_check
        _
      $region26: #{tpu_custom_call.1} parent=5 // pred_check_branch
        %127 = sbr.rel (%p124) target = $region28
      $region27: #{tpu_custom_call.1} parent=5 // pred_region
        %s128 = ssub.s32 %s11, 1
        %p129 = scmp.lt.s32.totalorder %s16, 2
        %s130 = scalar_select %p129, %s16, 2
        %s131 = smul.addr %s130, 8
        %s132 = scalar_lea.vmem %s0, %s131
        %p133 = pneg %p37
        %p134 = pneg %p34
        %p135 = scmp.lt.s32.totalorder %s16, 2
        %s136 = scalar_select %p135, %s16, 2
        %s137 = smul.addr %s136, 8
        %s138 = scalar_lea.vmem %s1, %s137
        %p139 = pneg %p63
        %p140 = pneg %p60
        %p141 = pneg %p89
        %p142 = pneg %p86
        %s143 = sand.u32 %s76, 1
        %s144 = scalar_lea.sflag [#allocation3], %s143
        %s145 = sand.u32 %s76, 1
        %s146 = scalar_lea.vmem [#allocation2], %s145
        %p147 = scmp.lt.s32.totalorder %s16, 2
        %s148 = scalar_select %p147, %s16, 2
        %s149 = smul.addr %s148, 8
        %s150 = scalar_lea.vmem %s0, %s149
        %p151 = scmp.lt.s32.totalorder %s16, 2
        %s152 = scalar_select %p151, %s16, 2
        %s153 = smul.addr %s152, 8
        %s154 = scalar_lea.vmem %s1, %s153
        %v155 = vld [vmem:[%s150] sm:$0xff]
        %v156 = vld [vmem:[%s154] sm:$0xff]
        %vm157 = vcmask 261120
        %v158 = vsel %vm157, %v155, -inf
        %159 = vmax.xlane.f32.xlu0 %v158
        %v160 = vpop.xlane.xlu0 %159
        %v161 = vsub.f32 %v155, %v160
        %v162 = vlaneseq
        %v163 = vand.u32 %v162, 127
        %164 = vset.pattern.permute.xlu0 0
        %165 = vperm.xlu0 %164, %v156
        %v166 = vpop.permute.xlu0 %165
        %vm167 = vcmp.eq.s32.totalorder %v163, %v166
        %v168 = vmul.f32 %v161, 1.442695
        %v169 = vpow.pop %v168
        %v170 = vsel %vm157, %v169, 0.0
        %171 = vadd.xlane.f32.xlu0 %v170
        %v172 = vpop.xlane.xlu0 %171
        %v173 = vsel %vm167, %v161, 0.0
        %v174 = vsel %vm157, %v173, 0.0
        %175 = vadd.xlane.f32.xlu0 %v174
        %v176 = vpop.xlane.xlu0 %175
        %v177 = vlog2.pop %v172
        %v178 = vmul.f32 %v177, 0.6931472
        %v179 = vsub.f32 %v178, %v176
        %v180 = vmul.f32 %v176, 1.442695
        %v181 = vpow.pop %v180
        %v182 = vrcp.pop %v172
        %v183 = vmul.f32 %v181, %v182
        %v184 = vsub.f32 1.0, %v183
        %v185 = vmax.f32 %v184, 0.0
        %v186 = vlog2.pop %v185
        %v187 = vmul.f32 %v186, 0.6931472
        %v188 = vmul.f32 %v187, 2.75
        %v189 = vmul.f32 %v188, 1.442695
        %v190 = vpow.pop %v189
        %v191 = vmul.f32 %v190, %v179
        %s192 = smul.u32 %s16, 8
        %v193 = vlaneseq
        %v194 = vshrl.u32 %v193, 7
        %v195 = vstv %s192
        %v196 = vadd.s32 %v195, %v194
        %vm197 = vcmp.lt.s32.totalorder %v196, 20
        %v198 = vsel %vm197, %v191, 0.0
        %vm199 = vcmask 7168
        %v200 = vsel %vm199, %v198, 0.0
        %201 = vadd.xlane.f32.xlu0 %v200
        %v202 = vpop.xlane.xlu0 %201
        %v203 = vrot.slane %v202, 4
        %v204 = vadd.f32 %v202, %v203
        %v205 = vrot.slane %v204, 2
        %v206 = vadd.f32 %v204, %v205
        %v207 = vrot.slane %v206, 1
        %v208 = vadd.f32 %v206, %v207
        %s209 = vtos %v208
        %v210 = vstv %s209
        %211 = vst [vmem:[%s146] sm:$0x1] %v210
        %s212 = sand.u32 %s76, 1
        %s213 = scalar_lea.sflag [#allocation3], %s212
        %s214 = sand.u32 %s76, 1
        %s215 = scalar_lea.vmem [#allocation2], %s214
        // Predicated region
        $region29: #{tpu_custom_call.1} parent=27 // pred_check
          %p216 = pneg %p86
        $region30: #{tpu_custom_call.1} parent=27 // pred_check_branch
          %218 = sbr.rel (%p216) target = $region32
        $region31: #{tpu_custom_call.1} parent=27 // pred_region
          %s220 = ssub.s32 16, 16
          %221 = vsyncadd %s213, %s220
          %s222 = smul.addr %s16, 16
          %s223 = scalar_lea.hbm %s2, %s222
          %s225 = sshll.u32 %s215, 4
          %s226 = int_to_ptr.vmem [resolvable:$true] %s225
          %228 = dma.vmem_to_hbm [thread:$0]  %s226, 16, %s223, %s213
        $region32: #{tpu_custom_call.1} parent=27 // pred_fallthru
          _
      $region28: #{tpu_custom_call.1} parent=5 // pred_fallthru
        _
      %p229 = scmp.le.s32.totalorder 2, %s11
      // Predicated region
      $region33: #{tpu_custom_call.1} parent=5 // pred_check
        %p230 = pneg %p229
      $region34: #{tpu_custom_call.1} parent=5 // pred_check_branch
        %232 = sbr.rel (%p230) target = $region36
      $region35: #{tpu_custom_call.1} parent=5 // pred_region
        %s233 = ssub.s32 %s11, 2
        // Predicated region
        $region37: #{tpu_custom_call.1} parent=35 // pred_check
          %p234 = pneg %p92
        $region38: #{tpu_custom_call.1} parent=35 // pred_check_branch
          %236 = sbr.rel (%p234) target = $region40
        $region39: #{tpu_custom_call.1} parent=35 // pred_region
          %s237 = sand.u32 %s77, 1
          %s238 = scalar_lea.sflag [#allocation3], %s237
          %s239 = sand.u32 %s77, 1
          %s240 = scalar_lea.vmem [#allocation2], %s239
          %241 = dma.done %s238, 16
        $region40: #{tpu_custom_call.1} parent=35 // pred_fallthru
          _
      $region36: #{tpu_custom_call.1} parent=5 // pred_fallthru
        _
    $region6: #{tpu_custom_call.1} parent=1 // loop_footer
      %s15 = sadd.s32 1, %s11
    $region7: #{tpu_custom_call.1} parent=1 // loop_footer_branch
      %10 = sbr.rel target = $region3
    $region8: #{tpu_custom_call.1} parent=1 // loop_exit
      _
    %242 = vsyncpa [#allocation3], 1
    %s243 = scalar_lea.sflag [#allocation3], 1
    %244 = vsyncpa %s243, 1

</llo_original>
